<compile_context>
chip_gen: v7x
topology: tpu7x:2x2x1
jax: 0.10.0
libtpu: 0.0.40
codegen_flags: <defaults>
</compile_context>

<pallas_src>
import jax
import jax.numpy as jnp
from jax.experimental import pallas as pl
from jax.experimental.pallas import tpu as pltpu


def _round_up(x, m):
    return (x + m - 1) // m * m


def _sublane(dtype):
    # Minimum sublane tile depends on dtype packing (f32:8, bf16:16, int8:32).
    return {4: 8, 2: 16, 1: 32}.get(jnp.dtype(dtype).itemsize, 8)


def _pick_tile(dim, cap, align):
    """Largest multiple of `align` <= cap that evenly divides `dim`.

    `dim` must already be a multiple of `align`, so this always terminates
    (worst case t == align).  Guarantees grid = dim // t exactly, i.e. no
    second level of padding to a tile multiple.
    """
    t = max(align, min(cap, dim))
    t = (t // align) * align
    while dim % t:
        t -= align
    return t


# --------------------------- tiny-shape fast path ---------------------------
def _mm_add_small_kernel(inp2_ref, x1_ref, x2_ref, o_ref):
    o_ref[...] = (
        jnp.dot(x1_ref[...], x2_ref[...], preferred_element_type=jnp.float32)
        + inp2_ref[0]
    ).astype(o_ref.dtype)


# ----------------------------- tiled large path ------------------------------
def _mm_add_tiled_kernel_f32(inp2_ref, x1_ref, x2_ref, o_ref):
    # Output block index is constant across k -> o_ref stays VMEM-resident;
    # accumulate directly into it (no scratch needed for an f32 output).
    k = pl.program_id(2)

    @pl.when(k == 0)
    def _():
        o_ref[...] = jnp.zeros_like(o_ref)

    o_ref[...] += jnp.dot(
        x1_ref[...], x2_ref[...], preferred_element_type=jnp.float32
    )

    @pl.when(k == pl.num_programs(2) - 1)
    def _():
        o_ref[...] += inp2_ref[0]  # folded 2*inp epilogue, single VPU add


def _mm_add_tiled_kernel_acc(inp2_ref, x1_ref, x2_ref, o_ref, acc_ref):
    # Non-f32 output: keep a f32 scratch accumulator and cast once at the end.
    k = pl.program_id(2)

    @pl.when(k == 0)
    def _():
        acc_ref[...] = jnp.zeros_like(acc_ref)

    acc_ref[...] += jnp.dot(
        x1_ref[...], x2_ref[...], preferred_element_type=jnp.float32
    )

    @pl.when(k == pl.num_programs(2) - 1)
    def _():
        o_ref[...] = (acc_ref[...] + inp2_ref[0]).astype(o_ref.dtype)


def model_forward(x1, x2, inp, *, tm_cap=512, tn_cap=512, tk_cap=1024,
                  small_bytes_threshold=512 * 1024):
    M, K = x1.shape
    K2, N = x2.shape
    assert K == K2, "inner dimensions must match"
    out_dtype = jnp.result_type(x1.dtype, x2.dtype)
    itemsize = jnp.dtype(out_dtype).itemsize

    # Fold the two scalar adds:  x1@x2 + inp + inp  ==  x1@x2 + 2*inp.
    inp2 = jnp.asarray([inp], dtype=jnp.float32) * 2.0

    total_bytes = (M * K + K * N + M * N) * itemsize
    flops = 2 * M * N * K

    # ---- tiny problems: whole (unpadded) arrays as single blocks -----------
    if total_bytes <= small_bytes_threshold:
        return pl.pallas_call(
            _mm_add_small_kernel,
            out_shape=jax.ShapeDtypeStruct((M, N), out_dtype),
            in_specs=[
                pl.BlockSpec(memory_space=pltpu.SMEM),  # folded scalar (2*inp)
                pl.BlockSpec(memory_space=pltpu.VMEM),  # x1, whole array
                pl.BlockSpec(memory_space=pltpu.VMEM),  # x2, whole array
            ],
            out_specs=pl.BlockSpec(memory_space=pltpu.VMEM),
            cost_estimate=pl.CostEstimate(
                flops=flops, transcendentals=0, bytes_accessed=total_bytes
            ),
        )(inp2, x1, x2)

    # ---- large problems: 3-D tiled grid, K innermost ------------------------
    sub = _sublane(out_dtype)
    Mp, Kp, Np = _round_up(M, sub), _round_up(K, 128), _round_up(N, 128)

    tm = _pick_tile(Mp, tm_cap, sub)
    tn = _pick_tile(Np, tn_cap, 128)
    tk = _pick_tile(Kp, tk_cap, 128)

    # v7x megacore: make sure at least one "parallel" axis has >= 2 blocks so
    # both TensorCores get work when the natural tiling is a single (i,j) tile.
    if Mp // tm == 1 and Np // tn == 1:
        if Mp > sub:
            tm = _pick_tile(Mp, max(sub, Mp // 2), sub)
        elif Np > 128:
            tn = _pick_tile(Np, max(128, Np // 2), 128)

    x1p = x1 if (Mp, Kp) == (M, K) else jnp.pad(x1, ((0, Mp - M), (0, Kp - K)))
    x2p = x2 if (Kp, Np) == (K, N) else jnp.pad(x2, ((0, Kp - K), (0, Np - N)))

    f32_out = out_dtype == jnp.float32
    kernel = _mm_add_tiled_kernel_f32 if f32_out else _mm_add_tiled_kernel_acc
    scratch = [] if f32_out else [pltpu.VMEM((tm, tn), jnp.float32)]

    out_p = pl.pallas_call(
        kernel,
        out_shape=jax.ShapeDtypeStruct((Mp, Np), out_dtype),
        grid_spec=pltpu.PrefetchScalarGridSpec(
            num_scalar_prefetch=0,
            grid=(Mp // tm, Np // tn, Kp // tk),
            in_specs=[
                # folded scalar lives in SMEM: never enters the VMEM pipeline
                pl.BlockSpec(memory_space=pltpu.SMEM),
                pl.BlockSpec((tm, tk), lambda i, j, k: (i, k)),  # x1 tile
                pl.BlockSpec((tk, tn), lambda i, j, k: (k, j)),  # x2 tile
            ],
            out_specs=pl.BlockSpec((tm, tn), lambda i, j, k: (i, j)),
            scratch_shapes=scratch,
        ),
        compiler_params=pltpu.CompilerParams(
            dimension_semantics=("parallel", "parallel", "arbitrary"),
            vmem_limit_bytes=32 * 1024 * 1024,
        ),
        cost_estimate=pl.CostEstimate(
            flops=2 * Mp * Np * Kp,
            transcendentals=0,
            bytes_accessed=(Mp * Kp + Kp * Np + Mp * Np) * itemsize,
        ),
    )(inp2, x1p, x2p)

    if (Mp, Np) != (M, N):
        out_p = out_p[:M, :N]
    return out_p


if __name__ == "__main__":
    key = jax.random.PRNGKey(0)
    k1, k2, k3, k4 = jax.random.split(key, 4)

    # ---- reference shapes from the PyTorch module: (6,5) @ (5,3), inp = 1 ---
    x1 = jax.random.normal(k1, (6, 5), dtype=jnp.float32)
    x2 = jax.random.normal(k2, (5, 3), dtype=jnp.float32)
    inp = 1.0

    out = jax.block_until_ready(model_forward(x1, x2, inp))
    ref = x1 @ x2 + inp + inp
    assert out.shape == (6, 3)
    assert jnp.allclose(out, ref, atol=1e-5, rtol=1e-5)

    # ---- also exercise the tiled path (padding, tile picking, megacore split)
    a = jax.random.normal(k3, (1000, 1030), dtype=jnp.float32)
    b = jax.random.normal(k4, (1030, 520), dtype=jnp.float32)
    out2 = jax.block_until_ready(model_forward(a, b, inp))
    ref2 = a @ b + 2.0 * inp
    assert out2.shape == (1000, 520)
    assert jnp.allclose(out2, ref2, atol=2e-2, rtol=2e-2)

    print("KERNEL_OK")
</pallas_src>

<mosaic_0001>
module attributes {stable_mosaic.version = 11 : i64} {
  func.func @_mm_add_small_kernel(%arg0: memref<1xf32, #tpu.memory_space<smem>>, %arg1: memref<6x5xf32, #tpu.memory_space<vmem>>, %arg2: memref<5x3xf32, #tpu.memory_space<vmem>>, %arg3: memref<6x3xf32, #tpu.memory_space<vmem>>) attributes {dimension_semantics = [], scalar_prefetch = 0 : i64, scratch_operands = 0 : i64, tpu.core_type = #tpu.core_type<tc>} {
    %c0 = arith.constant 0 : index
    %c0_0 = arith.constant 0 : index
    %0 = vector.load %arg1[%c0, %c0_0] : memref<6x5xf32, #tpu.memory_space<vmem>>, vector<6x5xf32>
    %c0_1 = arith.constant 0 : index
    %c0_2 = arith.constant 0 : index
    %1 = vector.load %arg2[%c0_1, %c0_2] : memref<5x3xf32, #tpu.memory_space<vmem>>, vector<5x3xf32>
    %cst = arith.constant dense<0.000000e+00> : vector<6x3xf32>
    %2 = tpu.matmul %0, %1, %cst {dimension_numbers = #tpu.dot_dimension_numbers<[1], [0], [0], [1], [0, 0, 1, 1], [], []>} : vector<6x5xf32>, vector<5x3xf32>, vector<6x3xf32> -> vector<6x3xf32>
    %c0_3 = arith.constant 0 : index
    %3 = memref.load %arg0[%c0_3] : memref<1xf32, #tpu.memory_space<smem>>
    %4 = vector.broadcast %3 : f32 to vector<6x3xf32>
    %5 = arith.addf %2, %4 : vector<6x3xf32>
    %c0_4 = arith.constant 0 : index
    %c0_5 = arith.constant 0 : index
    %6 = vector.load %arg3[%c0_4, %c0_5] : memref<6x3xf32, #tpu.memory_space<vmem>>, vector<6x3xf32>
    tpu.vector_store %arg3[%c0_4, %c0_5], %5 {strides = array<i32>} : memref<6x3xf32, #tpu.memory_space<vmem>>, vector<6x3xf32>,
    return
  }
}

</mosaic_0001>

<llo_original>
// kernel: tpu_custom_call.1
$region0: #{tpu_custom_call.1}
  #allocation0 [shape = 'u32[]', space=smem, size = 0x4, offset = 0x4, fixed_abs, tag = 'smem constant byte address 0x4 - core index']
  #allocation1 [shape = 'u32[144,128]{1,0:T(1,128)}', space=vmem, size = 0x12000, scoped, tag = 'internal scratch']
  #allocation2 [shape = 'f32[1]{0:T(128)S(6)}', space=smem, size = 0x200, scoped, tag = 'scoped memory for tpu_custom_call.1']
  %s0 = inlined_call_operand.<no memory space> [shape: f32[1], index: 0, kind: input, shape index: {}]
  %s1 = inlined_call_operand.vmem [shape: f32[6,5], index: 1, kind: input, shape index: {}]
  %s2 = inlined_call_operand.vmem [shape: f32[5,3], index: 2, kind: input, shape index: {}]
  %s3 = inlined_call_operand.vmem [shape: f32[6,3], index: 3, kind: output, shape index: {}]
  %s4 = sld [smem:[#allocation0]]
  $region22: #{tpu_custom_call.1} parent=0
    _
  %s6 = ssub.s32 1, %s4
  %s7 = scalar_select 0, %s6, %s4
  %8 = sst [smem:[#allocation2]] %s0
  // Predicated region
  $region2: #{tpu_custom_call.1} parent=0 // pred_check
    _
  $region3: #{tpu_custom_call.1} parent=0 // pred_check_branch
    %10 = sbr.rel (0) target = $region5
  $region4: #{tpu_custom_call.1} parent=0 // pred_region
    _
  $region5: #{tpu_custom_call.1} parent=0 // pred_fallthru
    _
  // Predicated region
  $region6: #{tpu_custom_call.1} parent=0 // pred_check
    _
  $region7: #{tpu_custom_call.1} parent=0 // pred_check_branch
    %12 = sbr.rel (0) target = $region9
  $region8: #{tpu_custom_call.1} parent=0 // pred_region
    _
  $region9: #{tpu_custom_call.1} parent=0 // pred_fallthru
    _
  // Predicated region
  $region10: #{tpu_custom_call.1} parent=0 // pred_check
    _
  $region11: #{tpu_custom_call.1} parent=0 // pred_check_branch
    %14 = sbr.rel (0) target = $region13
  $region12: #{tpu_custom_call.1} parent=0 // pred_region
    _
  $region13: #{tpu_custom_call.1} parent=0 // pred_fallthru
    _
  %v15 = vld [vmem:[%s1] sm:$0x3f]
  %v16 = vld [vmem:[%s2] sm:$0x1f]
  %s17 = sld [smem:[#allocation2]]
  %v18 = vstv %s17
  %vm19 = vcmask 39936
  %v21 = vsel %vm19, %v15, 0
  %vm23 = vcmask 1044480
  %v25 = vsel %vm23, %v16, 0
  %27 = vmatprep.subr.mxu0 0.0
  %28 = vmatpush1.msra.mxu0 %v25
  %29 = vmatprep.subr.mxu0 0.0
  %30 = vmatpush1.msra.mxu0 0.0
  %31 = vmatprep.subr.mxu0 0.0
  %32 = vmatpush1.msra.mxu0 0.0
  %33 = vmatprep.subr.mxu0 0.0
  %34 = vmatpush1.msra.mxu0 0.0
  %35 = vmatprep.subr.mxu0 0.0
  %36 = vmatpush1.msra.mxu0 0.0
  %37 = vmatprep.subr.mxu0 0.0
  %38 = vmatpush1.msra.mxu0 0.0
  %39 = vmatprep.subr.mxu0 0.0
  %40 = vmatpush1.msra.mxu0 0.0
  %41 = vmatprep.subr.mxu0 0.0
  %42 = vmatpush1.msra.mxu0 0.0
  %43 = vmatprep.subr.mxu0 0.0
  %44 = vmatpush1.msra.mxu0 0.0
  %45 = vmatprep.subr.mxu0 0.0
  %46 = vmatpush1.msra.mxu0 0.0
  %47 = vmatprep.subr.mxu0 0.0
  %48 = vmatpush1.msra.mxu0 0.0
  %49 = vmatprep.subr.mxu0 0.0
  %50 = vmatpush1.msra.mxu0 0.0
  %51 = vmatprep.subr.mxu0 0.0
  %52 = vmatpush1.msra.mxu0 0.0
  %53 = vmatprep.subr.mxu0 0.0
  %54 = vmatpush1.msra.mxu0 0.0
  %55 = vmatprep.subr.mxu0 0.0
  %56 = vmatpush1.msra.mxu0 0.0
  %57 = vmatprep.subr.mxu0 0.0
  %58 = vmatpush1.msra.mxu0 0.0
  %59 = vmatprep.subr.mxu0 0.0
  %60 = vmatpush1.msra.mxu0 0.0
  %61 = vmatprep.subr.mxu0 0.0
  %62 = vmatpush1.msra.mxu0 0.0
  %63 = vmatprep.subr.mxu0 0.0
  %64 = vmatpush1.msra.mxu0 0.0
  %65 = vmatprep.subr.mxu0 0.0
  %66 = vmatpush1.msra.mxu0 0.0
  %67 = vmatprep.subr.mxu0 0.0
  %68 = vmatpush1.msra.mxu0 0.0
  %69 = vmatprep.subr.mxu0 0.0
  %70 = vmatpush1.msra.mxu0 0.0
  %71 = vmatprep.subr.mxu0 0.0
  %72 = vmatpush1.msra.mxu0 0.0
  %73 = vmatprep.subr.mxu0 0.0
  %74 = vmatpush1.msra.mxu0 0.0
  %75 = vmatprep.subr.mxu0 0.0
  %76 = vmatpush1.msra.mxu0 0.0
  %77 = vmatprep.subr.mxu0 0.0
  %78 = vmatpush1.msra.mxu0 0.0
  %79 = vmatprep.subr.mxu0 0.0
  %80 = vmatpush1.msra.mxu0 0.0
  %81 = vmatprep.subr.mxu0 0.0
  %82 = vmatpush1.msra.mxu0 0.0
  %83 = vmatprep.subr.mxu0 0.0
  %84 = vmatpush1.msra.mxu0 0.0
  %85 = vmatprep.subr.mxu0 0.0
  %86 = vmatpush1.msra.mxu0 0.0
  %87 = vmatprep.subr.mxu0 0.0
  %88 = vmatpush1.msra.mxu0 0.0
  %89 = vmatprep.subr.mxu0 0.0
  %90 = vmatpush1.msra.mxu0 0.0
  %91 = vmatprep.mubr.f32.mxu0 0.0
  %92 = vmatmul.mubr.f32.gmra.mrb[0].mxu0 %v21
  %v93 = vpop.f32.mrb[0].mxu0
  %v94 = vadd.f32 %v18, %v93
  %v95 = vpop.f32.mrb[0].mxu0
  %96 = vdwg.mxu0
  %vm97 = vcmask 21504
  %98 = vst.msk [vmem:[%s3] sm:$0x3f] %vm97, %v94
  // Predicated region
  $region14: #{tpu_custom_call.1} parent=0 // pred_check
    _
  $region15: #{tpu_custom_call.1} parent=0 // pred_check_branch
    %100 = sbr.rel (0) target = $region17
  $region16: #{tpu_custom_call.1} parent=0 // pred_region
    _
  $region17: #{tpu_custom_call.1} parent=0 // pred_fallthru
    _
  // Predicated region
  $region18: #{tpu_custom_call.1} parent=0 // pred_check
    _
  $region19: #{tpu_custom_call.1} parent=0 // pred_check_branch
    %102 = sbr.rel (0) target = $region21
  $region20: #{tpu_custom_call.1} parent=0 // pred_region
    _
  $region21: #{tpu_custom_call.1} parent=0 // pred_fallthru
    _

</llo_original>
